<compile_context>
chip_gen: v6e
topology: v6e:2x2x1
jax: 0.10.0
libtpu: 0.0.40
codegen_flags: <defaults>
</compile_context>

<pallas_src>
import functools

import jax
import jax.numpy as jnp
from jax import lax
from jax.experimental import pallas as pl
from jax.experimental.pallas import tpu as pltpu

BN_EPS = 1e-5  # cfg.bn.eps default


def _round_up(x, m):
    return (x + m - 1) // m * m


def _fused_encoder_kernel(n_node, n_edge,
                          x_ref, w_ref, gamma_ref, beta_ref, o_ref):
    """One grid step handles one problem: p=0 -> nodes, p=1 -> edges.

    x_ref:     [R_pad, F_pad]  zero-padded input rows
    w_ref:     [F_pad, D]      linear weight (padded rows are zero)
    gamma_ref: [1, D]          BN affine scale
    beta_ref:  [1, D]          BN affine shift
    o_ref:     [R_pad, D]      output rows (padded rows sliced off by wrapper)
    """
    p = pl.program_id(0)
    n_rows = jnp.where(p == 0, n_node, n_edge).astype(jnp.int32)
    inv_n = 1.0 / n_rows.astype(jnp.float32)

    # Linear on the MXU with f32 accumulation.  The Linear bias is omitted:
    # training-mode BN subtracts the batch mean, which cancels any constant
    # per-feature bias exactly:  (x@w + b) - mean(x@w + b) == x@w - mean(x@w).
    h = jnp.dot(x_ref[...], w_ref[...], preferred_element_type=jnp.float32)

    # Row-validity mask: zero-padded rows must not contribute to batch stats.
    rows = lax.broadcasted_iota(jnp.int32, (h.shape[0], 1), 0)
    valid = rows < n_rows

    # Biased (training-mode) batch mean / variance over the row axis.
    mean = jnp.sum(jnp.where(valid, h, 0.0), axis=0, keepdims=True) * inv_n
    centered = h - mean
    var = jnp.sum(jnp.where(valid, centered * centered, 0.0),
                  axis=0, keepdims=True) * inv_n

    # Fold inv_std * gamma once per feature -> one multiply + one add / element.
    scale = lax.rsqrt(var + BN_EPS) * gamma_ref[...]
    o_ref[...] = (centered * scale + beta_ref[...]).astype(o_ref.dtype)


def feature_encoder_forward(params, node_x, edge_attr):
    """Mimics FeatureEncoder.forward on (batch.x, batch.edge_attr) with a
    single fused Pallas call covering both the node and edge paths."""
    n_node, f_node = node_x.shape
    n_edge, f_edge = edge_attr.shape
    D = params.node_w.shape[1]
    assert params.edge_w.shape[1] == D

    # Pad both problems to a common [R_pad, F_pad] so they share one
    # pallas_call with a size-2 leading grid axis.
    r_pad = _round_up(max(n_node, n_edge), 8)
    f_pad = max(f_node, f_edge)

    def pad2(a, r, c):
        return jnp.pad(a, ((0, r - a.shape[0]), (0, c - a.shape[1])))

    x = jnp.stack([pad2(node_x, r_pad, f_pad),
                   pad2(edge_attr, r_pad, f_pad)])                 # [2, R_pad, F_pad]
    w = jnp.stack([pad2(params.node_w, f_pad, D),
                   pad2(params.edge_w, f_pad, D)])                 # [2, F_pad, D]
    gamma = jnp.stack([params.node_gamma, params.edge_gamma]).reshape(2, 1, D)
    beta = jnp.stack([params.node_beta, params.edge_beta]).reshape(2, 1, D)

    kernel = functools.partial(_fused_encoder_kernel, n_node, n_edge)

    out = pl.pallas_call(
        kernel,
        out_shape=jax.ShapeDtypeStruct((2, r_pad, D), jnp.float32),
        grid=(2,),
        in_specs=[
            pl.BlockSpec((None, r_pad, f_pad), lambda p: (p, 0, 0)),
            pl.BlockSpec((None, f_pad, D), lambda p: (p, 0, 0)),
            pl.BlockSpec((None, 1, D), lambda p: (p, 0, 0)),
            pl.BlockSpec((None, 1, D), lambda p: (p, 0, 0)),
        ],
        out_specs=pl.BlockSpec((None, r_pad, D), lambda p: (p, 0, 0)),
        compiler_params=pltpu.CompilerParams(
            # Each grid step touches a distinct output block -> safe to shard
            # across v7x's two TensorCores; no-op on v5e/v6e (1 TC/chip).
            dimension_semantics=("parallel",)),
    )(x, w, gamma, beta)

    return {"x": out[0, :n_node, :], "edge_attr": out[1, :n_edge, :]}


class FeatureEncoderParams:
    """Deterministic synthetic parameters for FeatureEncoder."""

    def __init__(self, key, node_feat_dim, edge_feat_dim, dim_inner):
        k1, k2, k3, k4 = jax.random.split(key, 4)
        s_n = 1.0 / jnp.sqrt(jnp.float32(node_feat_dim))
        s_e = 1.0 / jnp.sqrt(jnp.float32(edge_feat_dim))
        # node_encoder: Linear(node_feat_dim -> dim_inner)
        self.node_w = jax.random.uniform(
            k1, (node_feat_dim, dim_inner), jnp.float32, -s_n, s_n)
        self.node_b = jax.random.uniform(
            k2, (dim_inner,), jnp.float32, -s_n, s_n)
        # node_encoder_bn: BatchNorm1d(dim_inner) — default init gamma=1, beta=0
        self.node_gamma = jnp.ones((dim_inner,), jnp.float32)
        self.node_beta = jnp.zeros((dim_inner,), jnp.float32)
        # edge_encoder: Linear(edge_feat_dim -> dim_edge == dim_inner)
        self.edge_w = jax.random.uniform(
            k3, (edge_feat_dim, dim_inner), jnp.float32, -s_e, s_e)
        self.edge_b = jax.random.uniform(
            k4, (dim_inner,), jnp.float32, -s_e, s_e)
        # edge_encoder_bn
        self.edge_gamma = jnp.ones((dim_inner,), jnp.float32)
        self.edge_beta = jnp.zeros((dim_inner,), jnp.float32)


def _reference(params, node_x, edge_attr):
    """Pure-JAX reference with the exact PyTorch math (bias included)."""
    def lin_bn(x, w, b, g, be):
        h = x @ w + b
        mean = h.mean(axis=0, keepdims=True)
        var = ((h - mean) ** 2).mean(axis=0, keepdims=True)
        return (h - mean) / jnp.sqrt(var + BN_EPS) * g + be
    return {
        "x": lin_bn(node_x, params.node_w, params.node_b,
                    params.node_gamma, params.node_beta),
        "edge_attr": lin_bn(edge_attr, params.edge_w, params.edge_b,
                            params.edge_gamma, params.edge_beta),
    }


if __name__ == "__main__":
    key = jax.random.PRNGKey(0)
    k_param, k_node, k_edge = jax.random.split(key, 3)

    num_nodes = 16        # graph batch: number of nodes
    num_edges = 32        # graph batch: number of edges
    node_feat_dim = 8     # raw node feature dim (dim_in)
    edge_feat_dim = 8     # raw edge feature dim
    dim_inner = 32        # cfg.gnn.dim_inner == cfg.gnn.dim_edge

    params = FeatureEncoderParams(k_param, node_feat_dim, edge_feat_dim,
                                  dim_inner)
    node_x = jax.random.normal(k_node, (num_nodes, node_feat_dim), jnp.float32)
    edge_attr = jax.random.normal(k_edge, (num_edges, edge_feat_dim),
                                  jnp.float32)

    out = feature_encoder_forward(params, node_x, edge_attr)
    out = jax.tree_util.tree_map(jax.block_until_ready, out)

    ref = _reference(params, node_x, edge_attr)
    assert out["x"].shape == ref["x"].shape
    assert out["edge_attr"].shape == ref["edge_attr"].shape
    assert jnp.allclose(out["x"], ref["x"], atol=1e-4, rtol=1e-4)
    assert jnp.allclose(out["edge_attr"], ref["edge_attr"], atol=1e-4, rtol=1e-4)

    print("KERNEL_OK")
</pallas_src>

<mosaic_0001>
module attributes {stable_mosaic.version = 11 : i64} {
  func.func @_fused_encoder_kernel(%arg0: i32, %arg1: memref<1x32x8xf32, #tpu.memory_space<vmem>>, %arg2: memref<1x8x32xf32, #tpu.memory_space<vmem>>, %arg3: memref<1x1x32xf32, #tpu.memory_space<vmem>>, %arg4: memref<1x1x32xf32, #tpu.memory_space<vmem>>, %arg5: memref<1x32x32xf32, #tpu.memory_space<vmem>>) attributes {dimension_semantics = [#tpu.dimension_semantics<parallel>], iteration_bounds = array<i64: 2>, scalar_prefetch = 0 : i64, scratch_operands = 0 : i64, tpu.core_type = #tpu.core_type<tc>, window_params = [{transform_indices = @transform_0, window_bounds = array<i64: 1, 32, 8>}, {transform_indices = @transform_1, window_bounds = array<i64: 1, 8, 32>}, {transform_indices = @transform_2, window_bounds = array<i64: 1, 1, 32>}, {transform_indices = @transform_3, window_bounds = array<i64: 1, 1, 32>}, {transform_indices = @transform_4, window_bounds = array<i64: 1, 32, 32>}]} {
    %c0_i32 = arith.constant 0 : i32
    %0 = arith.cmpi eq, %arg0, %c0_i32 : i32
    %c16_i32 = arith.constant 16 : i32
    %c32_i32 = arith.constant 32 : i32
    %1 = arith.select %0, %c16_i32, %c32_i32 : i32
    %2 = arith.sitofp %1 : i32 to f32
    %cst = arith.constant 1.000000e+00 : f32
    %3 = arith.divf %cst, %2 : f32
    %c0 = arith.constant 0 : index
    %c0_0 = arith.constant 0 : index
    %c0_1 = arith.constant 0 : index
    %4 = vector.load %arg1[%c0, %c0_0, %c0_1] : memref<1x32x8xf32, #tpu.memory_space<vmem>>, vector<1x32x8xf32>
    %5 = vector.shape_cast %4 : vector<1x32x8xf32> to vector<32x8xf32>
    %c0_2 = arith.constant 0 : index
    %c0_3 = arith.constant 0 : index
    %c0_4 = arith.constant 0 : index
    %6 = vector.load %arg2[%c0_2, %c0_3, %c0_4] : memref<1x8x32xf32, #tpu.memory_space<vmem>>, vector<1x8x32xf32>
    %7 = vector.shape_cast %6 : vector<1x8x32xf32> to vector<8x32xf32>
    %cst_5 = arith.constant dense<0.000000e+00> : vector<32x32xf32>
    %8 = tpu.matmul %5, %7, %cst_5 {dimension_numbers = #tpu.dot_dimension_numbers<[1], [0], [0], [1], [0, 0, 1, 1], [], []>} : vector<32x8xf32>, vector<8x32xf32>, vector<32x32xf32> -> vector<32x32xf32>
    %9 = tpu.iota {dimensions = array<i32: 0>} : vector<32x1xi32>
    %10 = vector.broadcast %1 : i32 to vector<32x1xi32>
    %11 = arith.cmpi slt, %9, %10 : vector<32x1xi32>
    %cst_6 = arith.constant 0.000000e+00 : f32
    %12 = vector.shape_cast %11 : vector<32x1xi1> to vector<32x1xi1>
    %13 = vector.broadcast %12 : vector<32x1xi1> to vector<32x32xi1>
    %14 = vector.broadcast %cst_6 : f32 to vector<32x32xf32>
    %15 = arith.select %13, %8, %14 : vector<32x32xi1>, vector<32x32xf32>
    %cst_7 = arith.constant dense<0.000000e+00> : vector<32xf32>
    %16 = vector.multi_reduction <add>, %15, %cst_7 [0] : vector<32x32xf32> to vector<32xf32>
    %17 = vector.shape_cast %16 : vector<32xf32> to vector<1x32xf32>
    %18 = vector.broadcast %3 : f32 to vector<1x32xf32>
    %19 = arith.mulf %17, %18 : vector<1x32xf32>
    %20 = vector.broadcast %19 : vector<1x32xf32> to vector<32x32xf32>
    %21 = arith.subf %8, %20 : vector<32x32xf32>
    %22 = arith.mulf %21, %21 : vector<32x32xf32>
    %cst_8 = arith.constant 0.000000e+00 : f32
    %23 = vector.shape_cast %11 : vector<32x1xi1> to vector<32x1xi1>
    %24 = vector.broadcast %23 : vector<32x1xi1> to vector<32x32xi1>
    %25 = vector.broadcast %cst_8 : f32 to vector<32x32xf32>
    %26 = arith.select %24, %22, %25 : vector<32x32xi1>, vector<32x32xf32>
    %cst_9 = arith.constant dense<0.000000e+00> : vector<32xf32>
    %27 = vector.multi_reduction <add>, %26, %cst_9 [0] : vector<32x32xf32> to vector<32xf32>
    %28 = vector.shape_cast %27 : vector<32xf32> to vector<1x32xf32>
    %29 = vector.broadcast %3 : f32 to vector<1x32xf32>
    %30 = arith.mulf %28, %29 : vector<1x32xf32>
    %cst_10 = arith.constant 9.99999974E-6 : f32
    %31 = vector.broadcast %cst_10 : f32 to vector<1x32xf32>
    %32 = arith.addf %30, %31 : vector<1x32xf32>
    %33 = math.rsqrt %32 : vector<1x32xf32>
    %c0_11 = arith.constant 0 : index
    %c0_12 = arith.constant 0 : index
    %c0_13 = arith.constant 0 : index
    %34 = vector.load %arg3[%c0_11, %c0_12, %c0_13] : memref<1x1x32xf32, #tpu.memory_space<vmem>>, vector<1x1x32xf32>
    %35 = vector.shape_cast %34 : vector<1x1x32xf32> to vector<1x32xf32>
    %36 = arith.mulf %33, %35 : vector<1x32xf32>
    %37 = vector.broadcast %36 : vector<1x32xf32> to vector<32x32xf32>
    %38 = arith.mulf %21, %37 : vector<32x32xf32>
    %c0_14 = arith.constant 0 : index
    %c0_15 = arith.constant 0 : index
    %c0_16 = arith.constant 0 : index
    %39 = vector.load %arg4[%c0_14, %c0_15, %c0_16] : memref<1x1x32xf32, #tpu.memory_space<vmem>>, vector<1x1x32xf32>
    %40 = vector.shape_cast %39 : vector<1x1x32xf32> to vector<1x32xf32>
    %41 = vector.broadcast %40 : vector<1x32xf32> to vector<32x32xf32>
    %42 = arith.addf %38, %41 : vector<32x32xf32>
    %c0_17 = arith.constant 0 : index
    %c0_18 = arith.constant 0 : index
    %c0_19 = arith.constant 0 : index
    %43 = vector.load %arg5[%c0_17, %c0_18, %c0_19] : memref<1x32x32xf32, #tpu.memory_space<vmem>>, vector<1x32x32xf32>
    %44 = vector.shape_cast %43 : vector<1x32x32xf32> to vector<32x32xf32>
    %45 = vector.shape_cast %42 : vector<32x32xf32> to vector<1x32x32xf32>
    tpu.vector_store %arg5[%c0_17, %c0_18, %c0_19], %45 {strides = array<i32>} : memref<1x32x32xf32, #tpu.memory_space<vmem>>, vector<1x32x32xf32>,
    return
  }
  func.func @transform_0(%arg0: i32) -> (i32, i32, i32) {
    %c0_i32 = arith.constant 0 : i32
    %c0_i32_0 = arith.constant 0 : i32
    %c0_i32_1 = arith.constant 0 : i32
    return %arg0, %c0_i32, %c0_i32_0 : i32, i32, i32
  }
  func.func @transform_1(%arg0: i32) -> (i32, i32, i32) {
    %c0_i32 = arith.constant 0 : i32
    %c0_i32_0 = arith.constant 0 : i32
    %c0_i32_1 = arith.constant 0 : i32
    return %arg0, %c0_i32, %c0_i32_0 : i32, i32, i32
  }
  func.func @transform_2(%arg0: i32) -> (i32, i32, i32) {
    %c0_i32 = arith.constant 0 : i32
    %c0_i32_0 = arith.constant 0 : i32
    %c0_i32_1 = arith.constant 0 : i32
    return %arg0, %c0_i32, %c0_i32_0 : i32, i32, i32
  }
  func.func @transform_3(%arg0: i32) -> (i32, i32, i32) {
    %c0_i32 = arith.constant 0 : i32
    %c0_i32_0 = arith.constant 0 : i32
    %c0_i32_1 = arith.constant 0 : i32
    return %arg0, %c0_i32, %c0_i32_0 : i32, i32, i32
  }
  func.func @transform_4(%arg0: i32) -> (i32, i32, i32) {
    %c0_i32 = arith.constant 0 : i32
    %c0_i32_0 = arith.constant 0 : i32
    %c0_i32_1 = arith.constant 0 : i32
    return %arg0, %c0_i32, %c0_i32_0 : i32, i32, i32
  }
}

</mosaic_0001>

<llo_original>
// kernel: tpu_custom_call.1
$region0: #{tpu_custom_call.1}
  #allocation0 [shape = 'u32[]', space=smem, size = 0x4, offset = 0x4, fixed_abs, tag = 'smem constant byte address 0x4 - core index']
  #allocation1 [shape = 'u32[144,128]{1,0:T(1,128)}', space=vmem, size = 0x12000, scoped, tag = 'internal scratch']
  %s0 = inlined_call_operand.vmem [shape: f32[2,32,8], index: 0, kind: input, shape index: {}]
  %s1 = inlined_call_operand.vmem [shape: f32[2,8,32], index: 1, kind: input, shape index: {}]
  %s2 = inlined_call_operand.vmem [shape: f32[2,1,32], index: 2, kind: input, shape index: {}]
  %s3 = inlined_call_operand.vmem [shape: f32[2,1,32], index: 3, kind: input, shape index: {}]
  %s4 = inlined_call_operand.hbm [shape: f32[2,32,32], index: 4, kind: output, shape index: {}]
  %s5 = sld [smem:[#allocation0]]
  $region49: #{tpu_custom_call.1} parent=0
    _
  %s7 = ssub.s32 1, %s5
  %s8 = scalar_select 0, %s7, %s5
  $region1: #{tpu_custom_call.1} parent=0
    #allocation2 [shape = 'u8[32768]{0}', space=vmem, size = 0x8000, scoped, tag = 'output window, operand 0']
    #allocation3 [shape = 's32[2]{0}', space=sflag, size = 0x8, scoped, tag = 'scoped memory for tpu_custom_call.1']
    %9 = vsyncpa [#allocation3], 0
    %s10 = scalar_lea.sflag [#allocation3], 1
    %11 = vsyncpa %s10, 0
    loop: start=0, step=1, limit=4
    $region2: #{tpu_custom_call.1} parent=1 // loop_pre_header
      _
    $region3: #{tpu_custom_call.1} parent=1 // loop_header
      %s13 = sphi 0, %s17
      %p14 = scmp.ge.s32.totalorder %s13, 4
      %s23 = sphi 0, %s25
      %s26 = sphi 0, %s23
      %s27 = sphi 0, %s26
      %s43 = sphi 0, %s27
      %s49 = sphi 0, %s51
      %s52 = sphi 0, %s49
      %s53 = sphi 0, %s52
      %s69 = sphi 0, %s53
      %s75 = sphi 0, %s77
      %s78 = sphi 0, %s75
      %s79 = sphi 0, %s78
      %s95 = sphi 0, %s79
      %s101 = sphi 0, %s103
      %s104 = sphi 0, %s101
      %s105 = sphi 0, %s104
      %s121 = sphi 0, %s105
      %s127 = sphi 0, %s129
      %s130 = sphi 0, %s127
      %s131 = sphi 0, %s130
      %s147 = sphi 0, %s131
    $region4: #{tpu_custom_call.1} parent=1 // loop_header_branch
      %16 = sbr.rel (%p14) target = $region8
    $region5: #{tpu_custom_call.1} parent=1 // loop_body
      %s18 = ssub.s32 %s13, 1
      %s19 = ssub.s32 %s13, 2
      %s20 = sadd.s32 %s13, 1
      %s21 = ssub.s32 %s13, %s20
      %p22 = scmp.eq.s32.totalorder %s21, 0
      %s24 = sadd.s32 %s23, 1
      %s25 = scalar_select %p22, %s23, %s24
      %p28 = pneg %p22
      %p29 = scmp.eq.s32.totalorder %s13, 1
      %p30 = por %p28, %p29
      %p31 = scmp.ne.s32.totalorder %s23, %s26
      %p32 = scmp.eq.s32.totalorder %s13, 0
      %p33 = por %p31, %p32
      %p34 = scmp.ne.s32.totalorder %s23, %s26
      %p35 = scmp.eq.s32.totalorder %s18, 1
      %p36 = por %p34, %p35
      %p37 = scmp.ne.s32.totalorder %s26, %s27
      %p38 = scmp.eq.s32.totalorder %s18, 0
      %p39 = por %p37, %p38
      %p40 = scmp.ne.s32.totalorder %s26, %s27
      %p41 = scmp.eq.s32.totalorder %s19, 1
      %p42 = por %p40, %p41
      %p44 = scmp.ne.s32.totalorder %s27, %s43
      %p45 = scmp.eq.s32.totalorder %s19, 0
      %p46 = por %p44, %p45
      %s47 = ssub.s32 %s13, %s20
      %p48 = scmp.eq.s32.totalorder %s47, 0
      %s50 = sadd.s32 %s49, 1
      %s51 = scalar_select %p48, %s49, %s50
      %p54 = pneg %p48
      %p55 = scmp.eq.s32.totalorder %s13, 1
      %p56 = por %p54, %p55
      %p57 = scmp.ne.s32.totalorder %s49, %s52
      %p58 = scmp.eq.s32.totalorder %s13, 0
      %p59 = por %p57, %p58
      %p60 = scmp.ne.s32.totalorder %s49, %s52
      %p61 = scmp.eq.s32.totalorder %s18, 1
      %p62 = por %p60, %p61
      %p63 = scmp.ne.s32.totalorder %s52, %s53
      %p64 = scmp.eq.s32.totalorder %s18, 0
      %p65 = por %p63, %p64
      %p66 = scmp.ne.s32.totalorder %s52, %s53
      %p67 = scmp.eq.s32.totalorder %s19, 1
      %p68 = por %p66, %p67
      %p70 = scmp.ne.s32.totalorder %s53, %s69
      %p71 = scmp.eq.s32.totalorder %s19, 0
      %p72 = por %p70, %p71
      %s73 = ssub.s32 %s13, %s20
      %p74 = scmp.eq.s32.totalorder %s73, 0
      %s76 = sadd.s32 %s75, 1
      %s77 = scalar_select %p74, %s75, %s76
      %p80 = pneg %p74
      %p81 = scmp.eq.s32.totalorder %s13, 1
      %p82 = por %p80, %p81
      %p83 = scmp.ne.s32.totalorder %s75, %s78
      %p84 = scmp.eq.s32.totalorder %s13, 0
      %p85 = por %p83, %p84
      %p86 = scmp.ne.s32.totalorder %s75, %s78
      %p87 = scmp.eq.s32.totalorder %s18, 1
      %p88 = por %p86, %p87
      %p89 = scmp.ne.s32.totalorder %s78, %s79
      %p90 = scmp.eq.s32.totalorder %s18, 0
      %p91 = por %p89, %p90
      %p92 = scmp.ne.s32.totalorder %s78, %s79
      %p93 = scmp.eq.s32.totalorder %s19, 1
      %p94 = por %p92, %p93
      %p96 = scmp.ne.s32.totalorder %s79, %s95
      %p97 = scmp.eq.s32.totalorder %s19, 0
      %p98 = por %p96, %p97
      %s99 = ssub.s32 %s13, %s20
      %p100 = scmp.eq.s32.totalorder %s99, 0
      %s102 = sadd.s32 %s101, 1
      %s103 = scalar_select %p100, %s101, %s102
      %p106 = pneg %p100
      %p107 = scmp.eq.s32.totalorder %s13, 1
      %p108 = por %p106, %p107
      %p109 = scmp.ne.s32.totalorder %s101, %s104
      %p110 = scmp.eq.s32.totalorder %s13, 0
      %p111 = por %p109, %p110
      %p112 = scmp.ne.s32.totalorder %s101, %s104
      %p113 = scmp.eq.s32.totalorder %s18, 1
      %p114 = por %p112, %p113
      %p115 = scmp.ne.s32.totalorder %s104, %s105
      %p116 = scmp.eq.s32.totalorder %s18, 0
      %p117 = por %p115, %p116
      %p118 = scmp.ne.s32.totalorder %s104, %s105
      %p119 = scmp.eq.s32.totalorder %s19, 1
      %p120 = por %p118, %p119
      %p122 = scmp.ne.s32.totalorder %s105, %s121
      %p123 = scmp.eq.s32.totalorder %s19, 0
      %p124 = por %p122, %p123
      %s125 = ssub.s32 %s13, %s20
      %p126 = scmp.eq.s32.totalorder %s125, 0
      %s128 = sadd.s32 %s127, 1
      %s129 = scalar_select %p126, %s127, %s128
      %p132 = pneg %p126
      %p133 = scmp.eq.s32.totalorder %s13, 1
      %p134 = por %p132, %p133
      %p135 = scmp.ne.s32.totalorder %s127, %s130
      %p136 = scmp.eq.s32.totalorder %s13, 0
      %p137 = por %p135, %p136
      %p138 = scmp.ne.s32.totalorder %s127, %s130
      %p139 = scmp.eq.s32.totalorder %s18, 1
      %p140 = por %p138, %p139
      %p141 = scmp.ne.s32.totalorder %s130, %s131
      %p142 = scmp.eq.s32.totalorder %s18, 0
      %p143 = por %p141, %p142
      %p144 = scmp.ne.s32.totalorder %s130, %s131
      %p145 = scmp.eq.s32.totalorder %s19, 1
      %p146 = por %p144, %p145
      %p148 = scmp.ne.s32.totalorder %s131, %s147
      %p149 = scmp.eq.s32.totalorder %s19, 0
      %p150 = por %p148, %p149
      %p151 = scmp.le.s32.totalorder 1, %s13
      %p152 = scmp.lt.s32.totalorder %s13, 3
      %p153 = pnand %p151, %p152
      %p154 = pneg %p153
      // Predicated region
      $region9: #{tpu_custom_call.1} parent=5 // pred_check
        _
      $region10: #{tpu_custom_call.1} parent=5 // pred_check_branch
        %156 = sbr.rel (%p153) target = $region12
      $region11: #{tpu_custom_call.1} parent=5 // pred_region
        %s157 = ssub.s32 %s13, 1
      $region12: #{tpu_custom_call.1} parent=5 // pred_fallthru
        _
      %p158 = scmp.lt.s32.totalorder %s13, 2
      // Predicated region
      $region13: #{tpu_custom_call.1} parent=5 // pred_check
        %p159 = pneg %p158
      $region14: #{tpu_custom_call.1} parent=5 // pred_check_branch
        %161 = sbr.rel (%p159) target = $region16
      $region15: #{tpu_custom_call.1} parent=5 // pred_region
        // Predicated region
        $region17: #{tpu_custom_call.1} parent=15 // pred_check
          %p162 = pneg %p33
        $region18: #{tpu_custom_call.1} parent=15 // pred_check_branch
          %164 = sbr.rel (%p162) target = $region20
        $region19: #{tpu_custom_call.1} parent=15 // pred_region
          %p165 = scmp.lt.s32.totalorder %s13, 1
          %s166 = scalar_select %p165, %s13, 1
          %s167 = smul.addr %s166, 4
          %s168 = smul.addr %s167, 8
          %s169 = scalar_lea.vmem %s0, %s168
        $region20: #{tpu_custom_call.1} parent=15 // pred_fallthru
          _
        // Predicated region
        $region21: #{tpu_custom_call.1} parent=15 // pred_check
          %p170 = pneg %p59
        $region22: #{tpu_custom_call.1} parent=15 // pred_check_branch
          %172 = sbr.rel (%p170) target = $region24
        $region23: #{tpu_custom_call.1} parent=15 // pred_region
          %p173 = scmp.lt.s32.totalorder %s13, 1
          %s174 = scalar_select %p173, %s13, 1
          %s175 = smul.addr %s174, 8
          %s176 = scalar_lea.vmem %s1, %s175
        $region24: #{tpu_custom_call.1} parent=15 // pred_fallthru
          _
        // Predicated region
        $region25: #{tpu_custom_call.1} parent=15 // pred_check
          %p177 = pneg %p85
        $region26: #{tpu_custom_call.1} parent=15 // pred_check_branch
          %179 = sbr.rel (%p177) target = $region28
        $region27: #{tpu_custom_call.1} parent=15 // pred_region
          %p180 = scmp.lt.s32.totalorder %s13, 1
          %s181 = scalar_select %p180, %s13, 1
          %s182 = scalar_lea.vmem %s2, %s181
        $region28: #{tpu_custom_call.1} parent=15 // pred_fallthru
          _
        // Predicated region
        $region29: #{tpu_custom_call.1} parent=15 // pred_check
          %p183 = pneg %p111
        $region30: #{tpu_custom_call.1} parent=15 // pred_check_branch
          %185 = sbr.rel (%p183) target = $region32
        $region31: #{tpu_custom_call.1} parent=15 // pred_region
          %p186 = scmp.lt.s32.totalorder %s13, 1
          %s187 = scalar_select %p186, %s13, 1
          %s188 = scalar_lea.vmem %s3, %s187
        $region32: #{tpu_custom_call.1} parent=15 // pred_fallthru
          _
      $region16: #{tpu_custom_call.1} parent=5 // pred_fallthru
        _
      %p189 = scmp.le.s32.totalorder 1, %s13
      %p190 = scmp.lt.s32.totalorder %s13, 3
      %p191 = pnand %p189, %p190
      %p192 = pneg %p191
      // Predicated region
      $region33: #{tpu_custom_call.1} parent=5 // pred_check
        _
      $region34: #{tpu_custom_call.1} parent=5 // pred_check_branch
        %194 = sbr.rel (%p191) target = $region36
      $region35: #{tpu_custom_call.1} parent=5 // pred_region
        %s195 = ssub.s32 %s13, 1
        %p196 = scmp.lt.s32.totalorder %s18, 1
        %s197 = scalar_select %p196, %s18, 1
        %s198 = smul.addr %s197, 4
        %s199 = smul.addr %s198, 8
        %s200 = scalar_lea.vmem %s0, %s199
        %p201 = pneg %p39
        %p202 = pneg %p36
        %p203 = scmp.lt.s32.totalorder %s18, 1
        %s204 = scalar_select %p203, %s18, 1
        %s205 = smul.addr %s204, 8
        %s206 = scalar_lea.vmem %s1, %s205
        %p207 = pneg %p65
        %p208 = pneg %p62
        %p209 = scmp.lt.s32.totalorder %s18, 1
        %s210 = scalar_select %p209, %s18, 1
        %s211 = scalar_lea.vmem %s2, %s210
        %p212 = pneg %p91
        %p213 = pneg %p88
        %p214 = scmp.lt.s32.totalorder %s18, 1
        %s215 = scalar_select %p214, %s18, 1
        %s216 = scalar_lea.vmem %s3, %s215
        %p217 = pneg %p117
        %p218 = pneg %p114
        %p219 = pneg %p143
        %p220 = pneg %p140
        %s221 = sand.u32 %s130, 1
        %s222 = scalar_lea.sflag [#allocation3], %s221
        %s223 = sand.u32 %s130, 1
        %s224 = smul.addr %s223, 32
        %s225 = scalar_lea.vmem [#allocation2], %s224
        %p226 = scmp.lt.s32.totalorder %s18, 1
        %s227 = scalar_select %p226, %s18, 1
        %s228 = smul.addr %s227, 4
        %s229 = smul.addr %s228, 8
        %s230 = scalar_lea.vmem %s0, %s229
        %p231 = scmp.lt.s32.totalorder %s18, 1
        %s232 = scalar_select %p231, %s18, 1
        %s233 = smul.addr %s232, 8
        %s234 = scalar_lea.vmem %s1, %s233
        %p235 = scmp.lt.s32.totalorder %s18, 1
        %s236 = scalar_select %p235, %s18, 1
        %s237 = scalar_lea.vmem %s2, %s236
        %p238 = scmp.lt.s32.totalorder %s18, 1
        %s239 = scalar_select %p238, %s18, 1
        %s240 = scalar_lea.vmem %s3, %s239
        %p241 = scmp.eq.s32.totalorder %s18, 0
        %s242 = scalar_select %p241, 16, 32
        %s243 = scvt.s32.f32 %s242
        %v244 = vstv %s243
        %v245 = vrcp.pop %v244
        %s246 = vtos %v245
        %v247 = vld [vmem:[%s230] sm:$0xff]
        %v248 = vld [vmem:[%s230 + $0x8] sm:$0xff]
        %v249 = vld [vmem:[%s230 + $0x10] sm:$0xff]
        %v250 = vld [vmem:[%s230 + $0x18] sm:$0xff]
        %v251 = vld [vmem:[%s234] sm:$0xff]
        %vm252 = vcmask 64512
        %v254 = vsel %vm252, %v247, 0
        %v257 = vsel %vm252, %v248, 0
        %v260 = vsel %vm252, %v249, 0
        %v263 = vsel %vm252, %v250, 0
        %265 = vmatprep.subr.mxu0 0.0
        %266 = vmatpush1.msra.mxu0 0.0
        %267 = vmatprep.subr.mxu0 0.0
        %268 = vmatpush1.msra.mxu0 0.0
        %269 = vmatprep.subr.mxu0 0.0
        %270 = vmatpush1.msra.mxu0 0.0
        %271 = vmatprep.subr.mxu0 0.0
        %272 = vmatpush1.msra.mxu0 0.0
        %273 = vmatprep.subr.mxu0 0.0
        %274 = vmatpush1.msra.mxu0 0.0
        %275 = vmatprep.subr.mxu0 0.0
        %276 = vmatpush1.msra.mxu0 0.0
        %277 = vmatprep.subr.mxu0 0.0
        %278 = vmatpush1.msra.mxu0 0.0
        %279 = vmatprep.subr.mxu0 0.0
        %280 = vmatpush1.msra.mxu0 0.0
        %281 = vmatprep.subr.mxu0 0.0
        %282 = vmatpush1.msra.mxu0 0.0
        %283 = vmatprep.subr.mxu0 0.0
        %284 = vmatpush1.msra.mxu0 0.0
        %285 = vmatprep.subr.mxu0 0.0
        %286 = vmatpush1.msra.mxu0 0.0
        %287 = vmatprep.subr.mxu0 0.0
        %288 = vmatpush1.msra.mxu0 0.0
        %289 = vmatprep.subr.mxu0 0.0
        %290 = vmatpush1.msra.mxu0 0.0
        %291 = vmatprep.subr.mxu0 0.0
        %292 = vmatpush1.msra.mxu0 0.0
        %293 = vmatprep.subr.mxu0 0.0
        %294 = vmatpush1.msra.mxu0 0.0
        %295 = vmatprep.subr.mxu0 0.0
        %296 = vmatpush1.msra.mxu0 %v251
        %297 = vmatprep.subr.mxu0 0.0
        %298 = vmatpush2.msra.mxu0 0.0
        %299 = vmatprep.subr.mxu0 0.0
        %300 = vmatpush2.msra.mxu0 0.0
        %301 = vmatprep.subr.mxu0 0.0
        %302 = vmatpush2.msra.mxu0 0.0
        %303 = vmatprep.subr.mxu0 0.0
        %304 = vmatpush2.msra.mxu0 0.0
        %305 = vmatprep.subr.mxu0 0.0
        %306 = vmatpush2.msra.mxu0 0.0
        %307 = vmatprep.subr.mxu0 0.0
        %308 = vmatpush2.msra.mxu0 0.0
        %309 = vmatprep.subr.mxu0 0.0
        %310 = vmatpush2.msra.mxu0 0.0
        %311 = vmatprep.subr.mxu0 0.0
        %312 = vmatpush2.msra.mxu0 0.0
        %313 = vmatprep.subr.mxu0 0.0
        %314 = vmatpush2.msra.mxu0 0.0
        %315 = vmatprep.subr.mxu0 0.0
        %316 = vmatpush2.msra.mxu0 0.0
        %317 = vmatprep.subr.mxu0 0.0
        %318 = vmatpush2.msra.mxu0 0.0
        %319 = vmatprep.subr.mxu0 0.0
        %320 = vmatpush2.msra.mxu0 0.0
        %321 = vmatprep.subr.mxu0 0.0
        %322 = vmatpush2.msra.mxu0 0.0
        %323 = vmatprep.subr.mxu0 0.0
        %324 = vmatpush2.msra.mxu0 0.0
        %325 = vmatprep.subr.mxu0 0.0
        %326 = vmatpush2.msra.mxu0 0.0
        %327 = vmatprep.subr.mxu0 0.0
        %328 = vmatpush2.msra.mxu0 0.0
        %329 = vmatprep.mubr.f32.mxu0 0.0
        %330 = vmatmul.mubr.f32.gmra.mxu0 %v254
        %v331 = vpop.f32.mrf.mxu0
        %v332 = vadd.f32 0.0, %v331
        %v333 = vpop.f32.mrf.mxu0
        %334 = vmatprep.mubr.f32.mxu0 0.0
        %335 = vmatmul.mubr.f32.gmra.mxu0 %v257
        %v336 = vpop.f32.mrf.mxu0
        %v337 = vadd.f32 0.0, %v336
        %v338 = vpop.f32.mrf.mxu0
        %339 = vmatprep.mubr.f32.mxu0 0.0
        %340 = vmatmul.mubr.f32.gmra.mxu0 %v260
        %v341 = vpop.f32.mrf.mxu0
        %v342 = vadd.f32 0.0, %v341
        %v343 = vpop.f32.mrf.mxu0
        %344 = vmatprep.mubr.f32.mxu0 0.0
        %345 = vmatmul.mubr.f32.gmra.mxu0 %v263
        %v346 = vpop.f32.mrf.mxu0
        %v347 = vadd.f32 0.0, %v346
        %v348 = vpop.f32.mrf.mxu0
        %349 = vdwg.mxu0
        %v350 = vlaneseq
        %v351 = vshrl.u32 %v350, 7
        %v352 = vadd.s32 %v351, 8
        %v353 = vadd.s32 %v351, 16
        %v354 = vadd.s32 %v351, 24
        %v355 = vstv %s242
        %vm356 = vcmp.lt.s32.totalorder %v351, %v355
        %vm357 = vcmp.lt.s32.totalorder %v352, %v355
        %vm358 = vcmp.lt.s32.totalorder %v353, %v355
        %vm359 = vcmp.lt.s32.totalorder %v354, %v355
        %v360 = vsel %vm356, 1, 0
        %v361 = vsel %vm357, 1, 0
        %v362 = vsel %vm358, 1, 0
        %v363 = vsel %vm359, 1, 0
        %vm364 = vcmp.eq.s32.totalorder %v360, 1
        %vm365 = vcmp.eq.s32.totalorder %v361, 1
        %vm366 = vcmp.eq.s32.totalorder %v362, 1
        %vm367 = vcmp.eq.s32.totalorder %v363, 1
        %v368 = vsel %vm364, %v332, 0.0
        %v369 = vsel %vm365, %v337, 0.0
        %v370 = vsel %vm366, %v342, 0.0
        %v371 = vsel %vm367, %v347, 0.0
        %vm372 = vcmask 261120
        %v373 = vsel %vm372, %v368, 0.0
        %v374 = vsel %vm372, %v369, 0.0
        %v375 = vadd.f32 %v373, %v374
        %v376 = vsel %vm372, %v370, 0.0
        %v377 = vadd.f32 %v375, %v376
        %v378 = vsel %vm372, %v371, 0.0
        %v379 = vadd.f32 %v377, %v378
        %v380 = vrot.slane %v379, 4
        %v381 = vadd.f32 %v379, %v380
        %v382 = vrot.slane %v381, 2
        %v383 = vadd.f32 %v381, %v382
        %v384 = vrot.slane %v383, 1
        %v385 = vadd.f32 %v383, %v384
        %v386 = vstv %s246
        %v387 = vmul.f32 %v385, %v386
        %v388 = vsub.f32 %v332, %v387
        %v389 = vsub.f32 %v337, %v387
        %v390 = vsub.f32 %v342, %v387
        %v391 = vsub.f32 %v347, %v387
        %v392 = vmul.f32 %v388, %v388
        %v393 = vmul.f32 %v389, %v389
        %v394 = vmul.f32 %v390, %v390
        %v395 = vmul.f32 %v391, %v391
        %v396 = vsel %vm364, %v392, 0.0
        %v397 = vsel %vm365, %v393, 0.0
        %v398 = vsel %vm366, %v394, 0.0
        %v399 = vsel %vm367, %v395, 0.0
        %v400 = vsel %vm372, %v396, 0.0
        %v401 = vsel %vm372, %v397, 0.0
        %v402 = vadd.f32 %v400, %v401
        %v403 = vsel %vm372, %v398, 0.0
        %v404 = vadd.f32 %v402, %v403
        %v405 = vsel %vm372, %v399, 0.0
        %v406 = vadd.f32 %v404, %v405
        %v407 = vrot.slane %v406, 4
        %v408 = vadd.f32 %v406, %v407
        %v409 = vrot.slane %v408, 2
        %v410 = vadd.f32 %v408, %v409
        %v411 = vrot.slane %v410, 1
        %v412 = vadd.f32 %v410, %v411
        %v413 = vmul.f32 %v412, %v386
        %v414 = vadd.f32 %v413, 1e-05
        %v415 = vrsqrt.pop %v414
        %v416 = vld [vmem:[%s237] sm:$0x1]
        %v417 = vmul.f32 %v415, %v416
        %v418 = vlaneseq
        %v419 = vshrl.u32 %v418, 7
        %v420 = vsub.s32 0, %v419
        %v421 = vrot.slane %v417, %v420
        %v422 = vmul.f32 %v388, %v421
        %v423 = vmul.f32 %v389, %v421
        %v424 = vmul.f32 %v390, %v421
        %v425 = vmul.f32 %v391, %v421
        %v426 = vld [vmem:[%s240] sm:$0x1]
        %v428 = vlaneseq
        %v429 = vshrl.u32 %v428, 7
        %v430 = vsub.s32 0, %v429
        %v431 = vrot.slane %v426, %v430
        %v433 = vadd.f32 %v422, %v431
        %v434 = vadd.f32 %v423, %v431
        %v435 = vadd.f32 %v424, %v431
        %v436 = vadd.f32 %v425, %v431
        %437 = vst.msk [vmem:[%s225] sm:$0xff] %vm372, %v433
        %438 = vst.msk [vmem:[%s225 + $0x8] sm:$0xff] %vm372, %v434
        %439 = vst.msk [vmem:[%s225 + $0x10] sm:$0xff] %vm372, %v435
        %440 = vst.msk [vmem:[%s225 + $0x18] sm:$0xff] %vm372, %v436
        %s441 = sand.u32 %s130, 1
        %s442 = scalar_lea.sflag [#allocation3], %s441
        %s443 = sand.u32 %s130, 1
        %s444 = smul.addr %s443, 32
        %s445 = scalar_lea.vmem [#allocation2], %s444
        // Predicated region
        $region37: #{tpu_custom_call.1} parent=35 // pred_check
          %p446 = pneg %p140
        $region38: #{tpu_custom_call.1} parent=35 // pred_check_branch
          %448 = sbr.rel (%p446) target = $region40
        $region39: #{tpu_custom_call.1} parent=35 // pred_region
          %s450 = ssub.s32 512, 512
          %451 = vsyncadd %s442, %s450
          %s452 = smul.addr %s18, 4
          %s453 = smul.addr %s452, 128
          %s454 = scalar_lea.hbm %s4, %s453
          %s455 = sshll.u32 %s445, 4
          %s456 = int_to_ptr.vmem [resolvable:$true] %s455
          %461 = dma.vmem_to_hbm [thread:$0]  %s456, 512, %s454, %s442, 128, 128, 8
        $region40: #{tpu_custom_call.1} parent=35 // pred_fallthru
          _
      $region36: #{tpu_custom_call.1} parent=5 // pred_fallthru
        _
      %p462 = scmp.le.s32.totalorder 2, %s13
      // Predicated region
      $region41: #{tpu_custom_call.1} parent=5 // pred_check
        %p463 = pneg %p462
      $region42: #{tpu_custom_call.1} parent=5 // pred_check_branch
        %465 = sbr.rel (%p463) target = $region44
      $region43: #{tpu_custom_call.1} parent=5 // pred_region
        %s466 = ssub.s32 %s13, 2
        // Predicated region
        $region45: #{tpu_custom_call.1} parent=43 // pred_check
          %p467 = pneg %p146
        $region46: #{tpu_custom_call.1} parent=43 // pred_check_branch
          %469 = sbr.rel (%p467) target = $region48
        $region47: #{tpu_custom_call.1} parent=43 // pred_region
          %s470 = sand.u32 %s131, 1
          %s471 = scalar_lea.sflag [#allocation3], %s470
          %s472 = sand.u32 %s131, 1
          %s473 = smul.addr %s472, 32
          %s474 = scalar_lea.vmem [#allocation2], %s473
          %475 = dma.done %s471, 512
        $region48: #{tpu_custom_call.1} parent=43 // pred_fallthru
          _
      $region44: #{tpu_custom_call.1} parent=5 // pred_fallthru
        _
    $region6: #{tpu_custom_call.1} parent=1 // loop_footer
      %s17 = sadd.s32 1, %s13
    $region7: #{tpu_custom_call.1} parent=1 // loop_footer_branch
      %12 = sbr.rel target = $region3
    $region8: #{tpu_custom_call.1} parent=1 // loop_exit
      _
    %476 = vsyncpa [#allocation3], 1
    %s477 = scalar_lea.sflag [#allocation3], 1
    %478 = vsyncpa %s477, 1

</llo_original>
